<compile_context>
chip_gen: v7x
topology: tpu7x:2x2x1
jax: 0.10.0
libtpu: 0.0.40
codegen_flags: <defaults>
</compile_context>

<pallas_src>
import jax
import jax.numpy as jnp
import numpy as np
from jax.experimental import pallas as pl
from jax.experimental.pallas import tpu as pltpu


def _argmax_rows(x):
    """First-occurrence argmax along the last axis, kept 2-D: (R, N) -> (R, 1) int32."""
    n = x.shape[-1]
    col = jax.lax.broadcasted_iota(jnp.int32, x.shape, dimension=x.ndim - 1)
    xmax = jnp.max(x, axis=-1, keepdims=True)
    idx = jnp.where(x >= xmax, col, n)
    return jnp.min(idx, axis=-1, keepdims=True).astype(jnp.int32)


def _efedgauss_fwd_kernel(data_ref, w_ref, tile_ref, mus_ref, muf_ref, seg_ref, lw_ref,
                          scores_ref, idx_ref):
    z = data_ref[...]        # (TB, D)   f32
    w = w_ref[...]           # (D, C*D)  f32  S_inv laid out as [d, (c, e)]
    t = tile_ref[...]        # (D, C*D)  f32  C copies of I_D side by side
    mus = mus_ref[...]       # (1, C*D)  f32  (mu_c @ S_inv_c) flattened over (c, e)
    muf = muf_ref[...]       # (1, C*D)  f32  mu flattened over (c, e)
    seg = seg_ref[...]       # (C*D, C)  f32  segment-sum matrix over e
    lw = lw_ref[...]         # (C, K)    f32  row-normalized class counts

    # Batched Mahalanobis distance for all clusters in one lane-dense MXU matmul:
    #   zs[b, c*D+e] = sum_d z[b, d] * S_inv[c, d, e]
    zs = jnp.dot(z, w, preferred_element_type=jnp.float32)        # (TB, C*D)
    # Replicate z across clusters via tiled identity (multiply by 1/0 -> exact).
    zt = jnp.dot(z, t, preferred_element_type=jnp.float32)        # (TB, C*D)
    # ((z - mu) S_inv) * (z - mu); (z - mu) factor kept exact.
    prod = (zs - mus) * (zt - muf)                                 # (TB, C*D)
    # Segment-sum over the feature axis e -> Mahalanobis distance per cluster.
    d2 = jnp.dot(prod, seg, preferred_element_type=jnp.float32)    # (TB, C)

    gamma = jnp.exp(-0.5 * d2)                                     # (TB, C)

    # Exact reciprocal + multiply (approx=True EUP reciprocal would exceed the 1e-5 check).
    inv_sum = pl.reciprocal(jnp.sum(gamma, axis=-1, keepdims=True) + 1e-12, approx=False)
    norm_gamma = gamma * inv_sum                                   # (TB, C)

    scores = jnp.dot(norm_gamma, lw, preferred_element_type=jnp.float32)  # (TB, K)

    scores_ref[...] = scores
    # Single (TB, 2) int32 output: col 0 = argmax_k scores (preds), col 1 = argmax_c gamma.
    idx_ref[...] = jnp.concatenate(
        [_argmax_rows(scores), _argmax_rows(gamma)], axis=-1)


def efedgauss_forward(data, mu, s_inv, cluster_labels, *, tile_b=None):
    """Pallas-backed eFedGauss.forward over the `c` active clusters.

    data:           (B, D) float32
    mu:             (C, D) float32          -- active cluster means
    s_inv:          (C, D, D) float32       -- active inverse scatter matrices
    cluster_labels: (C, K) int32            -- per-cluster class counts
    returns (scores (B, K) f32, preds_max (B,) i32, clusters (B,) i32)
    """
    B, D = data.shape
    C = mu.shape[0]
    K = cluster_labels.shape[1]
    CD = C * D

    # Explicit batch tile: keep each grid step lane/sublane friendly; cap at 1024 rows so
    # large batches get a multi-step pipelined grid (and megacore sharding on v7x).
    if tile_b is None:
        tile_b = B if B <= 1024 else 1024
    grid = (pl.cdiv(B, tile_b),)

    # ---- Host-side precompute (glue; part of defuzzify_batch / activation setup) ----
    lw = cluster_labels.astype(jnp.float32)
    lw = lw / (jnp.sum(lw, axis=1, keepdims=True) + 1e-12)                 # (C, K)

    w = jnp.transpose(s_inv, (1, 0, 2)).reshape(D, CD)                      # (D, C*D)
    tile_mat = jnp.tile(jnp.eye(D, dtype=jnp.float32), (1, C))              # (D, C*D)
    mus_flat = jnp.einsum('cd,cde->ce', mu, s_inv).reshape(1, CD)           # (1, C*D)
    mu_flat = mu.reshape(1, CD)                                             # (1, C*D)
    seg = (jnp.arange(CD, dtype=jnp.int32)[:, None] // D
           == jnp.arange(C, dtype=jnp.int32)[None, :]).astype(jnp.float32)  # (C*D, C)

    # Advisory cost estimate for the XLA scheduler.
    flops = 2 * B * D * CD * 2 + 2 * B * CD * C + 2 * B * C * K + 4 * B * CD
    bytes_accessed = 4 * (B * D + 2 * D * CD + 2 * CD + CD * C + C * K + B * K + 2 * B)
    cost = pl.CostEstimate(flops=int(flops), transcendentals=int(B * C),
                           bytes_accessed=int(bytes_accessed))

    out_shapes = (
        jax.ShapeDtypeStruct((B, K), jnp.float32),
        jax.ShapeDtypeStruct((B, 2), jnp.int32),
    )

    # NOTE: at larger C/D, re-budget the resident constant blocks (W/tile_mat/seg are
    # O(C*D*D) bytes and double-buffered by default) against v7x's 64 MiB VMEM, e.g. via
    # pltpu.CompilerParams(vmem_limit_bytes=...) or pipeline_mode=pl.Buffered(1) on them.
    scores, idx = pl.pallas_call(
        _efedgauss_fwd_kernel,
        out_shape=out_shapes,
        grid_spec=pltpu.PrefetchScalarGridSpec(
            num_scalar_prefetch=0,
            grid=grid,
            in_specs=[
                pl.BlockSpec((tile_b, D), lambda i: (i, 0)),   # data tile
                pl.BlockSpec((D, CD), lambda i: (0, 0)),       # S_inv as (D, C*D), resident
                pl.BlockSpec((D, CD), lambda i: (0, 0)),       # tiled identity, resident
                pl.BlockSpec((1, CD), lambda i: (0, 0)),       # mu @ S_inv, flattened
                pl.BlockSpec((1, CD), lambda i: (0, 0)),       # mu, flattened
                pl.BlockSpec((CD, C), lambda i: (0, 0)),       # segment-sum matrix
                pl.BlockSpec((C, K), lambda i: (0, 0)),        # label weights
            ],
            out_specs=[
                pl.BlockSpec((tile_b, K), lambda i: (i, 0)),   # scores
                pl.BlockSpec((tile_b, 2), lambda i: (i, 0)),   # [preds, clusters]
            ],
        ),
        compiler_params=pltpu.CompilerParams(
            dimension_semantics=("parallel",)),
        cost_estimate=cost,
    )(data, w, tile_mat, mus_flat, mu_flat, seg, lw)

    return scores, idx[:, 0], idx[:, 1]


def efedgauss_forward_ref(data, mu, s_inv, cluster_labels):
    """Pure-JAX reference of the same forward pass."""
    diff = data[:, None, :] - mu[None, :, :]                     # (B, C, D)
    d2 = jnp.einsum('bcd,cde,bce->bc', diff, s_inv, diff)
    gamma = jnp.exp(-0.5 * d2)
    lw = cluster_labels.astype(jnp.float32)
    lw = lw / (jnp.sum(lw, axis=1, keepdims=True) + 1e-12)
    ng = gamma / (jnp.sum(gamma, axis=1, keepdims=True) + 1e-12)
    scores = ng @ lw
    return (scores,
            jnp.argmax(scores, axis=1).astype(jnp.int32),
            jnp.argmax(gamma, axis=1).astype(jnp.int32))


if __name__ == "__main__":
    # Module hyperparameters (synthetic, deterministic).
    feature_dim = 32
    num_classes = 4
    c_max = 16          # current_capacity
    c = 10              # number of active clusters (model state after clustering)
    batch = 16
    S_0 = 1e-4          # init scatter scale from __init__ (S_0 * eye)

    key = jax.random.PRNGKey(0)
    k_data, k_mu, k_a = jax.random.split(key, 3)

    # Scale data a bit toward the cluster means so Gaussian activations stay well inside
    # f32 range while keeping distinct per-row argmax winners.
    data = 0.5 * jax.random.normal(k_data, (batch, feature_dim), dtype=jnp.float32)

    # Deterministic synthetic cluster state (capacity c_max, first c active).
    mu_full = jax.random.normal(k_mu, (c_max, feature_dim), dtype=jnp.float32)
    a = jax.random.normal(k_a, (c_max, feature_dim, feature_dim), dtype=jnp.float32)
    # Positive-definite inverse scatter matrices: A A^T / D + (1/S_0-ish) stabilized identity.
    s_inv_full = (jnp.einsum('cij,ckj->cik', a, a) / feature_dim
                  + jnp.eye(feature_dim, dtype=jnp.float32)[None] * (1.0 + S_0))
    # Per-cluster class-count table (int32), cluster j voted (j+1) times for class j % K.
    cluster_labels_full = jnp.zeros((c_max, num_classes), dtype=jnp.int32)
    cluster_labels_full = cluster_labels_full.at[
        jnp.arange(c_max), jnp.arange(c_max) % num_classes].set(jnp.arange(1, c_max + 1))

    # Only the first `c` clusters participate in forward (self.c).
    mu = mu_full[:c]
    s_inv = s_inv_full[:c]
    cluster_labels = cluster_labels_full[:c]

    # tile_b=8 -> 2 grid steps: exercises the pipelined / megacore-shardable batch grid.
    scores, preds_max, clusters = efedgauss_forward(
        data, mu, s_inv, cluster_labels, tile_b=8)
    jax.block_until_ready((scores, preds_max, clusters))

    scores_r, preds_r, clusters_r = efedgauss_forward_ref(data, mu, s_inv, cluster_labels)
    np.testing.assert_allclose(np.asarray(scores), np.asarray(scores_r), rtol=1e-5, atol=1e-5)
    np.testing.assert_array_equal(np.asarray(preds_max), np.asarray(preds_r))
    np.testing.assert_array_equal(np.asarray(clusters), np.asarray(clusters_r))

    print("KERNEL_OK")
</pallas_src>

<mosaic_0001>
module attributes {stable_mosaic.version = 11 : i64} {
  func.func @_efedgauss_fwd_kernel(%arg0: i32, %arg1: memref<8x32xf32, #tpu.memory_space<vmem>>, %arg2: memref<32x320xf32, #tpu.memory_space<vmem>>, %arg3: memref<32x320xf32, #tpu.memory_space<vmem>>, %arg4: memref<1x320xf32, #tpu.memory_space<vmem>>, %arg5: memref<1x320xf32, #tpu.memory_space<vmem>>, %arg6: memref<320x10xf32, #tpu.memory_space<vmem>>, %arg7: memref<10x4xf32, #tpu.memory_space<vmem>>, %arg8: memref<8x4xf32, #tpu.memory_space<vmem>>, %arg9: memref<8x2xi32, #tpu.memory_space<vmem>>) attributes {dimension_semantics = [#tpu.dimension_semantics<parallel>], iteration_bounds = array<i64: 2>, scalar_prefetch = 0 : i64, scratch_operands = 0 : i64, tpu.core_type = #tpu.core_type<tc>, window_params = [{transform_indices = @transform_0, window_bounds = array<i64: 8, 32>}, {pipeline_mode = #tpu.pipeline_mode<synchronous>, transform_indices = @transform_1, window_bounds = array<i64: 32, 320>}, {pipeline_mode = #tpu.pipeline_mode<synchronous>, transform_indices = @transform_2, window_bounds = array<i64: 32, 320>}, {pipeline_mode = #tpu.pipeline_mode<synchronous>, transform_indices = @transform_3, window_bounds = array<i64: 1, 320>}, {pipeline_mode = #tpu.pipeline_mode<synchronous>, transform_indices = @transform_4, window_bounds = array<i64: 1, 320>}, {pipeline_mode = #tpu.pipeline_mode<synchronous>, transform_indices = @transform_5, window_bounds = array<i64: 320, 10>}, {pipeline_mode = #tpu.pipeline_mode<synchronous>, transform_indices = @transform_6, window_bounds = array<i64: 10, 4>}, {transform_indices = @transform_7, window_bounds = array<i64: 8, 4>}, {transform_indices = @transform_8, window_bounds = array<i64: 8, 2>}]} {
    %c0 = arith.constant 0 : index
    %c0_0 = arith.constant 0 : index
    %0 = vector.load %arg1[%c0, %c0_0] : memref<8x32xf32, #tpu.memory_space<vmem>>, vector<8x32xf32>
    %c0_1 = arith.constant 0 : index
    %c0_2 = arith.constant 0 : index
    %1 = vector.load %arg2[%c0_1, %c0_2] : memref<32x320xf32, #tpu.memory_space<vmem>>, vector<32x320xf32>
    %c0_3 = arith.constant 0 : index
    %c0_4 = arith.constant 0 : index
    %2 = vector.load %arg3[%c0_3, %c0_4] : memref<32x320xf32, #tpu.memory_space<vmem>>, vector<32x320xf32>
    %c0_5 = arith.constant 0 : index
    %c0_6 = arith.constant 0 : index
    %3 = vector.load %arg4[%c0_5, %c0_6] : memref<1x320xf32, #tpu.memory_space<vmem>>, vector<1x320xf32>
    %c0_7 = arith.constant 0 : index
    %c0_8 = arith.constant 0 : index
    %4 = vector.load %arg5[%c0_7, %c0_8] : memref<1x320xf32, #tpu.memory_space<vmem>>, vector<1x320xf32>
    %c0_9 = arith.constant 0 : index
    %c0_10 = arith.constant 0 : index
    %5 = vector.load %arg6[%c0_9, %c0_10] : memref<320x10xf32, #tpu.memory_space<vmem>>, vector<320x10xf32>
    %c0_11 = arith.constant 0 : index
    %c0_12 = arith.constant 0 : index
    %6 = vector.load %arg7[%c0_11, %c0_12] : memref<10x4xf32, #tpu.memory_space<vmem>>, vector<10x4xf32>
    %cst = arith.constant dense<0.000000e+00> : vector<8x320xf32>
    %7 = tpu.matmul %0, %1, %cst {dimension_numbers = #tpu.dot_dimension_numbers<[1], [0], [0], [1], [0, 0, 1, 1], [], []>} : vector<8x32xf32>, vector<32x320xf32>, vector<8x320xf32> -> vector<8x320xf32>
    %cst_13 = arith.constant dense<0.000000e+00> : vector<8x320xf32>
    %8 = tpu.matmul %0, %2, %cst_13 {dimension_numbers = #tpu.dot_dimension_numbers<[1], [0], [0], [1], [0, 0, 1, 1], [], []>} : vector<8x32xf32>, vector<32x320xf32>, vector<8x320xf32> -> vector<8x320xf32>
    %9 = vector.broadcast %3 : vector<1x320xf32> to vector<8x320xf32>
    %10 = arith.subf %7, %9 : vector<8x320xf32>
    %11 = vector.broadcast %4 : vector<1x320xf32> to vector<8x320xf32>
    %12 = arith.subf %8, %11 : vector<8x320xf32>
    %13 = arith.mulf %10, %12 : vector<8x320xf32>
    %cst_14 = arith.constant dense<0.000000e+00> : vector<8x10xf32>
    %14 = tpu.matmul %13, %5, %cst_14 {dimension_numbers = #tpu.dot_dimension_numbers<[1], [0], [0], [1], [0, 0, 1, 1], [], []>} : vector<8x320xf32>, vector<320x10xf32>, vector<8x10xf32> -> vector<8x10xf32>
    %cst_15 = arith.constant -5.000000e-01 : f32
    %15 = vector.broadcast %cst_15 : f32 to vector<8x10xf32>
    %16 = arith.mulf %15, %14 : vector<8x10xf32>
    %17 = math.exp %16 : vector<8x10xf32>
    %cst_16 = arith.constant dense<0.000000e+00> : vector<8xf32>
    %18 = vector.multi_reduction <add>, %17, %cst_16 [1] : vector<8x10xf32> to vector<8xf32>
    %19 = vector.shape_cast %18 : vector<8xf32> to vector<8x1xf32>
    %cst_17 = arith.constant 9.99999996E-13 : f32
    %20 = vector.broadcast %cst_17 : f32 to vector<8x1xf32>
    %21 = arith.addf %19, %20 : vector<8x1xf32>
    %22 = tpu.reciprocal %21 : vector<8x1xf32> -> vector<8x1xf32>
    %23 = vector.broadcast %22 : vector<8x1xf32> to vector<8x10xf32>
    %24 = arith.mulf %17, %23 : vector<8x10xf32>
    %cst_18 = arith.constant dense<0.000000e+00> : vector<8x4xf32>
    %25 = tpu.matmul %24, %6, %cst_18 {dimension_numbers = #tpu.dot_dimension_numbers<[1], [0], [0], [1], [0, 0, 1, 1], [], []>} : vector<8x10xf32>, vector<10x4xf32>, vector<8x4xf32> -> vector<8x4xf32>
    %c0_19 = arith.constant 0 : index
    %c0_20 = arith.constant 0 : index
    %26 = vector.load %arg8[%c0_19, %c0_20] : memref<8x4xf32, #tpu.memory_space<vmem>>, vector<8x4xf32>
    tpu.vector_store %arg8[%c0_19, %c0_20], %25 {strides = array<i32>} : memref<8x4xf32, #tpu.memory_space<vmem>>, vector<8x4xf32>,
    %27 = tpu.iota {dimensions = array<i32: 1>} : vector<8x4xi32>
    %cst_21 = arith.constant dense<0xFF800000> : vector<8xf32>
    %28 = vector.multi_reduction <maximumf>, %25, %cst_21 [1] : vector<8x4xf32> to vector<8xf32>
    %29 = vector.shape_cast %28 : vector<8xf32> to vector<8x1xf32>
    %30 = vector.broadcast %29 : vector<8x1xf32> to vector<8x4xf32>
    %31 = arith.cmpf oge, %25, %30 : vector<8x4xf32>
    %c4_i32 = arith.constant 4 : i32
    %32 = vector.broadcast %c4_i32 : i32 to vector<8x4xi32>
    %33 = arith.select %31, %27, %32 : vector<8x4xi1>, vector<8x4xi32>
    %cst_22 = arith.constant dense<2147483647> : vector<8xi32>
    %34 = vector.multi_reduction <minsi>, %33, %cst_22 [1] : vector<8x4xi32> to vector<8xi32>
    %35 = vector.shape_cast %34 : vector<8xi32> to vector<8x1xi32>
    %36 = tpu.iota {dimensions = array<i32: 1>} : vector<8x10xi32>
    %cst_23 = arith.constant dense<0xFF800000> : vector<8xf32>
    %37 = vector.multi_reduction <maximumf>, %17, %cst_23 [1] : vector<8x10xf32> to vector<8xf32>
    %38 = vector.shape_cast %37 : vector<8xf32> to vector<8x1xf32>
    %39 = vector.broadcast %38 : vector<8x1xf32> to vector<8x10xf32>
    %40 = arith.cmpf oge, %17, %39 : vector<8x10xf32>
    %c10_i32 = arith.constant 10 : i32
    %41 = vector.broadcast %c10_i32 : i32 to vector<8x10xi32>
    %42 = arith.select %40, %36, %41 : vector<8x10xi1>, vector<8x10xi32>
    %cst_24 = arith.constant dense<2147483647> : vector<8xi32>
    %43 = vector.multi_reduction <minsi>, %42, %cst_24 [1] : vector<8x10xi32> to vector<8xi32>
    %44 = vector.shape_cast %43 : vector<8xi32> to vector<8x1xi32>
    %45 = tpu.concatenate %35, %44 in 1 : vector<8x1xi32>, vector<8x1xi32> -> vector<8x2xi32>
    %c0_25 = arith.constant 0 : index
    %c0_26 = arith.constant 0 : index
    %46 = vector.load %arg9[%c0_25, %c0_26] : memref<8x2xi32, #tpu.memory_space<vmem>>, vector<8x2xi32>
    tpu.vector_store %arg9[%c0_25, %c0_26], %45 {strides = array<i32>} : memref<8x2xi32, #tpu.memory_space<vmem>>, vector<8x2xi32>,
    return
  }
  func.func @transform_0(%arg0: i32) -> (i32, i32) {
    %c0_i32 = arith.constant 0 : i32
    %c0_i32_0 = arith.constant 0 : i32
    return %arg0, %c0_i32 : i32, i32
  }
  func.func @transform_1(%arg0: i32) -> (i32, i32) {
    %c0_i32 = arith.constant 0 : i32
    %c0_i32_0 = arith.constant 0 : i32
    %c0_i32_1 = arith.constant 0 : i32
    return %c0_i32, %c0_i32_0 : i32, i32
  }
  func.func @transform_2(%arg0: i32) -> (i32, i32) {
    %c0_i32 = arith.constant 0 : i32
    %c0_i32_0 = arith.constant 0 : i32
    %c0_i32_1 = arith.constant 0 : i32
    return %c0_i32, %c0_i32_0 : i32, i32
  }
  func.func @transform_3(%arg0: i32) -> (i32, i32) {
    %c0_i32 = arith.constant 0 : i32
    %c0_i32_0 = arith.constant 0 : i32
    %c0_i32_1 = arith.constant 0 : i32
    return %c0_i32, %c0_i32_0 : i32, i32
  }
  func.func @transform_4(%arg0: i32) -> (i32, i32) {
    %c0_i32 = arith.constant 0 : i32
    %c0_i32_0 = arith.constant 0 : i32
    %c0_i32_1 = arith.constant 0 : i32
    return %c0_i32, %c0_i32_0 : i32, i32
  }
  func.func @transform_5(%arg0: i32) -> (i32, i32) {
    %c0_i32 = arith.constant 0 : i32
    %c0_i32_0 = arith.constant 0 : i32
    %c0_i32_1 = arith.constant 0 : i32
    return %c0_i32, %c0_i32_0 : i32, i32
  }
  func.func @transform_6(%arg0: i32) -> (i32, i32) {
    %c0_i32 = arith.constant 0 : i32
    %c0_i32_0 = arith.constant 0 : i32
    %c0_i32_1 = arith.constant 0 : i32
    return %c0_i32, %c0_i32_0 : i32, i32
  }
  func.func @transform_7(%arg0: i32) -> (i32, i32) {
    %c0_i32 = arith.constant 0 : i32
    %c0_i32_0 = arith.constant 0 : i32
    return %arg0, %c0_i32 : i32, i32
  }
  func.func @transform_8(%arg0: i32) -> (i32, i32) {
    %c0_i32 = arith.constant 0 : i32
    %c0_i32_0 = arith.constant 0 : i32
    return %arg0, %c0_i32 : i32, i32
  }
}

</mosaic_0001>

<llo_original>
// kernel: tpu_custom_call.1
$region0: #{tpu_custom_call.1}
  #allocation0 [shape = 'u32[]', space=smem, size = 0x4, offset = 0x4, fixed_abs, tag = 'smem constant byte address 0x4 - core index']
  #allocation1 [shape = 'u32[144,128]{1,0:T(1,128)}', space=vmem, size = 0x12000, scoped, tag = 'internal scratch']
  %s0 = inlined_call_operand.vmem [shape: f32[16,32], index: 0, kind: input, shape index: {}]
  %s1 = inlined_call_operand.vmem [shape: f32[32,320], index: 1, kind: input, shape index: {}]
  %s2 = inlined_call_operand.vmem [shape: f32[32,320], index: 2, kind: input, shape index: {}]
  %s3 = inlined_call_operand.vmem [shape: f32[1,320], index: 3, kind: input, shape index: {}]
  %s4 = inlined_call_operand.vmem [shape: f32[1,320], index: 4, kind: input, shape index: {}]
  %s5 = inlined_call_operand.vmem [shape: f32[320,10], index: 5, kind: input, shape index: {}]
  %s6 = inlined_call_operand.vmem [shape: f32[10,4], index: 6, kind: input, shape index: {}]
  %s7 = inlined_call_operand.vmem [shape: f32[16,4], index: 7, kind: output, shape index: {0}]
  %s8 = inlined_call_operand.vmem [shape: s32[16,2], index: 8, kind: output, shape index: {1}]
  %9 = xla_tuple %s7, %s8
  %s10 = sld [smem:[#allocation0]]
  $region69: #{tpu_custom_call.1} parent=0
    _
  %s12 = ssub.s32 1, %s10
  %s13 = scalar_select 0, %s12, %s10
  loop: start=0, step=1, limit=4
  $region2: #{tpu_custom_call.1} parent=0 // loop_pre_header
    _
  $region3: #{tpu_custom_call.1} parent=0 // loop_header
    %s15 = sphi 0, %s19
    %p16 = scmp.ge.s32.totalorder %s15, 4
    %s25 = sphi 0, %s27
    %s28 = sphi 0, %s25
    %s29 = sphi 0, %s28
    %s45 = sphi 0, %s29
    %s49 = sphi 0, %s49
    %s51 = sphi 0, %s49
    %s52 = sphi 0, %s51
    %s66 = sphi 0, %s52
    %s70 = sphi 0, %s70
    %s72 = sphi 0, %s70
    %s73 = sphi 0, %s72
    %s87 = sphi 0, %s73
    %s91 = sphi 0, %s91
    %s93 = sphi 0, %s91
    %s94 = sphi 0, %s93
    %s108 = sphi 0, %s94
    %s112 = sphi 0, %s112
    %s114 = sphi 0, %s112
    %s115 = sphi 0, %s114
    %s129 = sphi 0, %s115
    %s133 = sphi 0, %s133
    %s135 = sphi 0, %s133
    %s136 = sphi 0, %s135
    %s150 = sphi 0, %s136
    %s154 = sphi 0, %s154
    %s156 = sphi 0, %s154
    %s157 = sphi 0, %s156
    %s171 = sphi 0, %s157
    %s177 = sphi 0, %s179
    %s180 = sphi 0, %s177
    %s181 = sphi 0, %s180
    %s197 = sphi 0, %s181
    %s203 = sphi 0, %s205
    %s206 = sphi 0, %s203
    %s207 = sphi 0, %s206
    %s223 = sphi 0, %s207
  $region4: #{tpu_custom_call.1} parent=0 // loop_header_branch
    %18 = sbr.rel (%p16) target = $region8
  $region5: #{tpu_custom_call.1} parent=0 // loop_body
    %s20 = ssub.s32 %s15, 1
    %s21 = ssub.s32 %s15, 2
    %s22 = sadd.s32 %s15, 1
    %s23 = ssub.s32 %s15, %s22
    %p24 = scmp.eq.s32.totalorder %s23, 0
    %s26 = sadd.s32 %s25, 1
    %s27 = scalar_select %p24, %s25, %s26
    %p30 = pneg %p24
    %p31 = scmp.eq.s32.totalorder %s15, 1
    %p32 = por %p30, %p31
    %p33 = scmp.ne.s32.totalorder %s25, %s28
    %p34 = scmp.eq.s32.totalorder %s15, 0
    %p35 = por %p33, %p34
    %p36 = scmp.ne.s32.totalorder %s25, %s28
    %p37 = scmp.eq.s32.totalorder %s20, 1
    %p38 = por %p36, %p37
    %p39 = scmp.ne.s32.totalorder %s28, %s29
    %p40 = scmp.eq.s32.totalorder %s20, 0
    %p41 = por %p39, %p40
    %p42 = scmp.ne.s32.totalorder %s28, %s29
    %p43 = scmp.eq.s32.totalorder %s21, 1
    %p44 = por %p42, %p43
    %p46 = scmp.ne.s32.totalorder %s29, %s45
    %p47 = scmp.eq.s32.totalorder %s21, 0
    %p48 = por %p46, %p47
    %s50 = sadd.s32 %s49, 1
    %p53 = scmp.eq.s32.totalorder %s15, 1
    %p54 = scmp.ne.s32.totalorder %s49, %s51
    %p55 = scmp.eq.s32.totalorder %s15, 0
    %p56 = por %p54, %p55
    %p57 = scmp.ne.s32.totalorder %s49, %s51
    %p58 = scmp.eq.s32.totalorder %s20, 1
    %p59 = por %p57, %p58
    %p60 = scmp.ne.s32.totalorder %s51, %s52
    %p61 = scmp.eq.s32.totalorder %s20, 0
    %p62 = por %p60, %p61
    %p63 = scmp.ne.s32.totalorder %s51, %s52
    %p64 = scmp.eq.s32.totalorder %s21, 1
    %p65 = por %p63, %p64
    %p67 = scmp.ne.s32.totalorder %s52, %s66
    %p68 = scmp.eq.s32.totalorder %s21, 0
    %p69 = por %p67, %p68
    %s71 = sadd.s32 %s70, 1
    %p74 = scmp.eq.s32.totalorder %s15, 1
    %p75 = scmp.ne.s32.totalorder %s70, %s72
    %p76 = scmp.eq.s32.totalorder %s15, 0
    %p77 = por %p75, %p76
    %p78 = scmp.ne.s32.totalorder %s70, %s72
    %p79 = scmp.eq.s32.totalorder %s20, 1
    %p80 = por %p78, %p79
    %p81 = scmp.ne.s32.totalorder %s72, %s73
    %p82 = scmp.eq.s32.totalorder %s20, 0
    %p83 = por %p81, %p82
    %p84 = scmp.ne.s32.totalorder %s72, %s73
    %p85 = scmp.eq.s32.totalorder %s21, 1
    %p86 = por %p84, %p85
    %p88 = scmp.ne.s32.totalorder %s73, %s87
    %p89 = scmp.eq.s32.totalorder %s21, 0
    %p90 = por %p88, %p89
    %s92 = sadd.s32 %s91, 1
    %p95 = scmp.eq.s32.totalorder %s15, 1
    %p96 = scmp.ne.s32.totalorder %s91, %s93
    %p97 = scmp.eq.s32.totalorder %s15, 0
    %p98 = por %p96, %p97
    %p99 = scmp.ne.s32.totalorder %s91, %s93
    %p100 = scmp.eq.s32.totalorder %s20, 1
    %p101 = por %p99, %p100
    %p102 = scmp.ne.s32.totalorder %s93, %s94
    %p103 = scmp.eq.s32.totalorder %s20, 0
    %p104 = por %p102, %p103
    %p105 = scmp.ne.s32.totalorder %s93, %s94
    %p106 = scmp.eq.s32.totalorder %s21, 1
    %p107 = por %p105, %p106
    %p109 = scmp.ne.s32.totalorder %s94, %s108
    %p110 = scmp.eq.s32.totalorder %s21, 0
    %p111 = por %p109, %p110
    %s113 = sadd.s32 %s112, 1
    %p116 = scmp.eq.s32.totalorder %s15, 1
    %p117 = scmp.ne.s32.totalorder %s112, %s114
    %p118 = scmp.eq.s32.totalorder %s15, 0
    %p119 = por %p117, %p118
    %p120 = scmp.ne.s32.totalorder %s112, %s114
    %p121 = scmp.eq.s32.totalorder %s20, 1
    %p122 = por %p120, %p121
    %p123 = scmp.ne.s32.totalorder %s114, %s115
    %p124 = scmp.eq.s32.totalorder %s20, 0
    %p125 = por %p123, %p124
    %p126 = scmp.ne.s32.totalorder %s114, %s115
    %p127 = scmp.eq.s32.totalorder %s21, 1
    %p128 = por %p126, %p127
    %p130 = scmp.ne.s32.totalorder %s115, %s129
    %p131 = scmp.eq.s32.totalorder %s21, 0
    %p132 = por %p130, %p131
    %s134 = sadd.s32 %s133, 1
    %p137 = scmp.eq.s32.totalorder %s15, 1
    %p138 = scmp.ne.s32.totalorder %s133, %s135
    %p139 = scmp.eq.s32.totalorder %s15, 0
    %p140 = por %p138, %p139
    %p141 = scmp.ne.s32.totalorder %s133, %s135
    %p142 = scmp.eq.s32.totalorder %s20, 1
    %p143 = por %p141, %p142
    %p144 = scmp.ne.s32.totalorder %s135, %s136
    %p145 = scmp.eq.s32.totalorder %s20, 0
    %p146 = por %p144, %p145
    %p147 = scmp.ne.s32.totalorder %s135, %s136
    %p148 = scmp.eq.s32.totalorder %s21, 1
    %p149 = por %p147, %p148
    %p151 = scmp.ne.s32.totalorder %s136, %s150
    %p152 = scmp.eq.s32.totalorder %s21, 0
    %p153 = por %p151, %p152
    %s155 = sadd.s32 %s154, 1
    %p158 = scmp.eq.s32.totalorder %s15, 1
    %p159 = scmp.ne.s32.totalorder %s154, %s156
    %p160 = scmp.eq.s32.totalorder %s15, 0
    %p161 = por %p159, %p160
    %p162 = scmp.ne.s32.totalorder %s154, %s156
    %p163 = scmp.eq.s32.totalorder %s20, 1
    %p164 = por %p162, %p163
    %p165 = scmp.ne.s32.totalorder %s156, %s157
    %p166 = scmp.eq.s32.totalorder %s20, 0
    %p167 = por %p165, %p166
    %p168 = scmp.ne.s32.totalorder %s156, %s157
    %p169 = scmp.eq.s32.totalorder %s21, 1
    %p170 = por %p168, %p169
    %p172 = scmp.ne.s32.totalorder %s157, %s171
    %p173 = scmp.eq.s32.totalorder %s21, 0
    %p174 = por %p172, %p173
    %s175 = ssub.s32 %s15, %s22
    %p176 = scmp.eq.s32.totalorder %s175, 0
    %s178 = sadd.s32 %s177, 1
    %s179 = scalar_select %p176, %s177, %s178
    %p182 = pneg %p176
    %p183 = scmp.eq.s32.totalorder %s15, 1
    %p184 = por %p182, %p183
    %p185 = scmp.ne.s32.totalorder %s177, %s180
    %p186 = scmp.eq.s32.totalorder %s15, 0
    %p187 = por %p185, %p186
    %p188 = scmp.ne.s32.totalorder %s177, %s180
    %p189 = scmp.eq.s32.totalorder %s20, 1
    %p190 = por %p188, %p189
    %p191 = scmp.ne.s32.totalorder %s180, %s181
    %p192 = scmp.eq.s32.totalorder %s20, 0
    %p193 = por %p191, %p192
    %p194 = scmp.ne.s32.totalorder %s180, %s181
    %p195 = scmp.eq.s32.totalorder %s21, 1
    %p196 = por %p194, %p195
    %p198 = scmp.ne.s32.totalorder %s181, %s197
    %p199 = scmp.eq.s32.totalorder %s21, 0
    %p200 = por %p198, %p199
    %s201 = ssub.s32 %s15, %s22
    %p202 = scmp.eq.s32.totalorder %s201, 0
    %s204 = sadd.s32 %s203, 1
    %s205 = scalar_select %p202, %s203, %s204
    %p208 = pneg %p202
    %p209 = scmp.eq.s32.totalorder %s15, 1
    %p210 = por %p208, %p209
    %p211 = scmp.ne.s32.totalorder %s203, %s206
    %p212 = scmp.eq.s32.totalorder %s15, 0
    %p213 = por %p211, %p212
    %p214 = scmp.ne.s32.totalorder %s203, %s206
    %p215 = scmp.eq.s32.totalorder %s20, 1
    %p216 = por %p214, %p215
    %p217 = scmp.ne.s32.totalorder %s206, %s207
    %p218 = scmp.eq.s32.totalorder %s20, 0
    %p219 = por %p217, %p218
    %p220 = scmp.ne.s32.totalorder %s206, %s207
    %p221 = scmp.eq.s32.totalorder %s21, 1
    %p222 = por %p220, %p221
    %p224 = scmp.ne.s32.totalorder %s207, %s223
    %p225 = scmp.eq.s32.totalorder %s21, 0
    %p226 = por %p224, %p225
    %p227 = scmp.le.s32.totalorder 1, %s15
    %p228 = scmp.lt.s32.totalorder %s15, 3
    %p229 = pnand %p227, %p228
    %p230 = pneg %p229
    // Predicated region
    $region9: #{tpu_custom_call.1} parent=5 // pred_check
      _
    $region10: #{tpu_custom_call.1} parent=5 // pred_check_branch
      %232 = sbr.rel (%p229) target = $region12
    $region11: #{tpu_custom_call.1} parent=5 // pred_region
      %s233 = ssub.s32 %s15, 1
      // Predicated region
      $region13: #{tpu_custom_call.1} parent=11 // pred_check
        %p234 = pneg %p62
      $region14: #{tpu_custom_call.1} parent=11 // pred_check_branch
        %236 = sbr.rel (%p234) target = $region16
      $region15: #{tpu_custom_call.1} parent=11 // pred_region
        _
      $region16: #{tpu_custom_call.1} parent=11 // pred_fallthru
        _
      // Predicated region
      $region17: #{tpu_custom_call.1} parent=11 // pred_check
        %p237 = pneg %p83
      $region18: #{tpu_custom_call.1} parent=11 // pred_check_branch
        %239 = sbr.rel (%p237) target = $region20
      $region19: #{tpu_custom_call.1} parent=11 // pred_region
        _
      $region20: #{tpu_custom_call.1} parent=11 // pred_fallthru
        _
      // Predicated region
      $region21: #{tpu_custom_call.1} parent=11 // pred_check
        %p240 = pneg %p104
      $region22: #{tpu_custom_call.1} parent=11 // pred_check_branch
        %242 = sbr.rel (%p240) target = $region24
      $region23: #{tpu_custom_call.1} parent=11 // pred_region
        _
      $region24: #{tpu_custom_call.1} parent=11 // pred_fallthru
        _
      // Predicated region
      $region25: #{tpu_custom_call.1} parent=11 // pred_check
        %p243 = pneg %p125
      $region26: #{tpu_custom_call.1} parent=11 // pred_check_branch
        %245 = sbr.rel (%p243) target = $region28
      $region27: #{tpu_custom_call.1} parent=11 // pred_region
        _
      $region28: #{tpu_custom_call.1} parent=11 // pred_fallthru
        _
      // Predicated region
      $region29: #{tpu_custom_call.1} parent=11 // pred_check
        %p246 = pneg %p146
      $region30: #{tpu_custom_call.1} parent=11 // pred_check_branch
        %248 = sbr.rel (%p246) target = $region32
      $region31: #{tpu_custom_call.1} parent=11 // pred_region
        _
      $region32: #{tpu_custom_call.1} parent=11 // pred_fallthru
        _
      // Predicated region
      $region33: #{tpu_custom_call.1} parent=11 // pred_check
        %p249 = pneg %p167
      $region34: #{tpu_custom_call.1} parent=11 // pred_check_branch
        %251 = sbr.rel (%p249) target = $region36
      $region35: #{tpu_custom_call.1} parent=11 // pred_region
        _
      $region36: #{tpu_custom_call.1} parent=11 // pred_fallthru
        _
    $region12: #{tpu_custom_call.1} parent=5 // pred_fallthru
      _
    %p252 = scmp.lt.s32.totalorder %s15, 2
    // Predicated region
    $region37: #{tpu_custom_call.1} parent=5 // pred_check
      %p253 = pneg %p252
    $region38: #{tpu_custom_call.1} parent=5 // pred_check_branch
      %255 = sbr.rel (%p253) target = $region40
    $region39: #{tpu_custom_call.1} parent=5 // pred_region
      // Predicated region
      $region41: #{tpu_custom_call.1} parent=39 // pred_check
        %p256 = pneg %p35
      $region42: #{tpu_custom_call.1} parent=39 // pred_check_branch
        %258 = sbr.rel (%p256) target = $region44
      $region43: #{tpu_custom_call.1} parent=39 // pred_region
        %p259 = scmp.lt.s32.totalorder %s15, 1
        %s260 = scalar_select %p259, %s15, 1
        %s261 = smul.addr %s260, 8
        %s262 = scalar_lea.vmem %s0, %s261
      $region44: #{tpu_custom_call.1} parent=39 // pred_fallthru
        _
    $region40: #{tpu_custom_call.1} parent=5 // pred_fallthru
      _
    %p263 = scmp.le.s32.totalorder 1, %s15
    %p264 = scmp.lt.s32.totalorder %s15, 3
    %p265 = pnand %p263, %p264
    %p266 = pneg %p265
    // Predicated region
    $region45: #{tpu_custom_call.1} parent=5 // pred_check
      _
    $region46: #{tpu_custom_call.1} parent=5 // pred_check_branch
      %268 = sbr.rel (%p265) target = $region48
    $region47: #{tpu_custom_call.1} parent=5 // pred_region
      %s269 = ssub.s32 %s15, 1
      %p270 = scmp.lt.s32.totalorder %s20, 1
      %s271 = scalar_select %p270, %s20, 1
      %s272 = smul.addr %s271, 8
      %s273 = scalar_lea.vmem %s0, %s272
      %p274 = pneg %p41
      %p275 = pneg %p38
      %p276 = pneg %p62
      %p277 = pneg %p59
      %p278 = pneg %p83
      %p279 = pneg %p80
      %p280 = pneg %p104
      %p281 = pneg %p101
      %p282 = pneg %p125
      %p283 = pneg %p122
      %p284 = pneg %p146
      %p285 = pneg %p143
      %p286 = pneg %p167
      %p287 = pneg %p164
      %p288 = pneg %p193
      %p289 = pneg %p190
      %p290 = scmp.lt.s32.totalorder %s20, 1
      %s291 = scalar_select %p290, %s20, 1
      %s292 = smul.addr %s291, 8
      %s293 = scalar_lea.vmem %s7, %s292
      %p294 = pneg %p219
      %p295 = pneg %p216
      %p296 = scmp.lt.s32.totalorder %s20, 1
      %s297 = scalar_select %p296, %s20, 1
      %s298 = smul.addr %s297, 8
      %s299 = scalar_lea.vmem %s8, %s298
      %p300 = scmp.lt.s32.totalorder %s20, 1
      %s301 = scalar_select %p300, %s20, 1
      %s302 = smul.addr %s301, 8
      %s303 = scalar_lea.vmem %s0, %s302
      %p304 = scmp.lt.s32.totalorder %s20, 1
      %s305 = scalar_select %p304, %s20, 1
      %s306 = smul.addr %s305, 8
      %s307 = scalar_lea.vmem %s7, %s306
      %p308 = scmp.lt.s32.totalorder %s20, 1
      %s309 = scalar_select %p308, %s20, 1
      %s310 = smul.addr %s309, 8
      %s311 = scalar_lea.vmem %s8, %s310
      %v312 = vld [vmem:[%s303] sm:$0xff]
      %v313 = vld [vmem:[%s1] sm:$0xff]
      %v314 = vld [vmem:[%s1 + $0x8] sm:$0xff]
      %v315 = vld [vmem:[%s1 + $0x10] sm:$0xff]
      %v316 = vld [vmem:[%s1 + $0x18] sm:$0xff]
      %v317 = vld [vmem:[%s1 + $0x20] sm:$0xff]
      %v318 = vld [vmem:[%s1 + $0x28] sm:$0xff]
      %v319 = vld [vmem:[%s1 + $0x30] sm:$0xff]
      %v320 = vld [vmem:[%s1 + $0x38] sm:$0xff]
      %v321 = vld [vmem:[%s1 + $0x40] sm:$0xff]
      %v322 = vld [vmem:[%s1 + $0x48] sm:$0xff]
      %v323 = vld [vmem:[%s1 + $0x50] sm:$0xff]
      %v324 = vld [vmem:[%s1 + $0x58] sm:$0xff]
      %v325 = vld [vmem:[%s2] sm:$0xff]
      %v326 = vld [vmem:[%s2 + $0x8] sm:$0xff]
      %v327 = vld [vmem:[%s2 + $0x10] sm:$0xff]
      %v328 = vld [vmem:[%s2 + $0x18] sm:$0xff]
      %v329 = vld [vmem:[%s2 + $0x20] sm:$0xff]
      %v330 = vld [vmem:[%s2 + $0x28] sm:$0xff]
      %v331 = vld [vmem:[%s2 + $0x30] sm:$0xff]
      %v332 = vld [vmem:[%s2 + $0x38] sm:$0xff]
      %v333 = vld [vmem:[%s2 + $0x40] sm:$0xff]
      %v334 = vld [vmem:[%s2 + $0x48] sm:$0xff]
      %v335 = vld [vmem:[%s2 + $0x50] sm:$0xff]
      %v336 = vld [vmem:[%s2 + $0x58] sm:$0xff]
      %v337 = vld [vmem:[%s3] sm:$0x7]
      %v338 = vld [vmem:[%s4] sm:$0x7]
      %v339 = vld [vmem:[%s5] sm:$0xff]
      %v340 = vld [vmem:[%s5 + $0x8] sm:$0xff]
      %v341 = vld [vmem:[%s5 + $0x10] sm:$0xff]
      %v342 = vld [vmem:[%s5 + $0x18] sm:$0xff]
      %v343 = vld [vmem:[%s5 + $0x20] sm:$0xff]
      %v344 = vld [vmem:[%s5 + $0x28] sm:$0xff]
      %v345 = vld [vmem:[%s5 + $0x30] sm:$0xff]
      %v346 = vld [vmem:[%s5 + $0x38] sm:$0xff]
      %v347 = vld [vmem:[%s5 + $0x40] sm:$0xff]
      %v348 = vld [vmem:[%s5 + $0x48] sm:$0xff]
      %v349 = vld [vmem:[%s5 + $0x50] sm:$0xff]
      %v350 = vld [vmem:[%s5 + $0x58] sm:$0xff]
      %v351 = vld [vmem:[%s5 + $0x60] sm:$0xff]
      %v352 = vld [vmem:[%s5 + $0x68] sm:$0xff]
      %v353 = vld [vmem:[%s5 + $0x70] sm:$0xff]
      %v354 = vld [vmem:[%s5 + $0x78] sm:$0xff]
      %v355 = vld [vmem:[%s5 + $0x80] sm:$0xff]
      %v356 = vld [vmem:[%s5 + $0x88] sm:$0xff]
      %v357 = vld [vmem:[%s5 + $0x90] sm:$0xff]
      %v358 = vld [vmem:[%s5 + $0x98] sm:$0xff]
      %v359 = vld [vmem:[%s5 + $0xa0] sm:$0xff]
      %v360 = vld [vmem:[%s5 + $0xa8] sm:$0xff]
      %v361 = vld [vmem:[%s5 + $0xb0] sm:$0xff]
      %v362 = vld [vmem:[%s5 + $0xb8] sm:$0xff]
      %v363 = vld [vmem:[%s5 + $0xc0] sm:$0xff]
      %v364 = vld [vmem:[%s5 + $0xc8] sm:$0xff]
      %v365 = vld [vmem:[%s5 + $0xd0] sm:$0xff]
      %v366 = vld [vmem:[%s5 + $0xd8] sm:$0xff]
      %v367 = vld [vmem:[%s5 + $0xe0] sm:$0xff]
      %v368 = vld [vmem:[%s5 + $0xe8] sm:$0xff]
      %v369 = vld [vmem:[%s5 + $0xf0] sm:$0xff]
      %v370 = vld [vmem:[%s5 + $0xf8] sm:$0xff]
      %v371 = vld [vmem:[%s5 + $0x100] sm:$0xff]
      %v372 = vld [vmem:[%s5 + $0x108] sm:$0xff]
      %v373 = vld [vmem:[%s5 + $0x110] sm:$0xff]
      %v374 = vld [vmem:[%s5 + $0x118] sm:$0xff]
      %v375 = vld [vmem:[%s5 + $0x120] sm:$0xff]
      %v376 = vld [vmem:[%s5 + $0x128] sm:$0xff]
      %v377 = vld [vmem:[%s5 + $0x130] sm:$0xff]
      %v378 = vld [vmem:[%s5 + $0x138] sm:$0xff]
      %v379 = vld [vmem:[%s6] sm:$0xff]
      %v380 = vld [vmem:[%s6 + $0x8] sm:$0x3]
      %vm381 = vcmask 261120
      %v383 = vsel %vm381, %v312, 0
      %385 = vmatprep.subr.mxu0 %v314
      %386 = vmatpush1.msra.mxu0 %v313
      %387 = vmatprep.subr.mxu0 %v317
      %388 = vmatpush1.msra.mxu0 %v316
      %389 = vmatprep.subr.mxu0 %v320
      %390 = vmatpush1.msra.mxu0 %v319
      %391 = vmatprep.subr.mxu0 %v323
      %392 = vmatpush1.msra.mxu0 %v322
      %393 = vmatprep.subr.mxu0 0.0
      %394 = vmatpush1.msra.mxu0 0.0
      %395 = vmatprep.subr.mxu0 0.0
      %396 = vmatpush1.msra.mxu0 0.0
      %397 = vmatprep.subr.mxu0 0.0
      %398 = vmatpush1.msra.mxu0 0.0
      %399 = vmatprep.subr.mxu0 0.0
      %400 = vmatpush1.msra.mxu0 0.0
      %401 = vmatprep.subr.mxu0 0.0
      %402 = vmatpush1.msra.mxu0 0.0
      %403 = vmatprep.subr.mxu0 0.0
      %404 = vmatpush1.msra.mxu0 0.0
      %405 = vmatprep.subr.mxu0 0.0
      %406 = vmatpush1.msra.mxu0 0.0
      %407 = vmatprep.subr.mxu0 0.0
      %408 = vmatpush1.msra.mxu0 0.0
      %409 = vmatprep.subr.mxu0 0.0
      %410 = vmatpush1.msra.mxu0 0.0
      %411 = vmatprep.subr.mxu0 0.0
      %412 = vmatpush1.msra.mxu0 0.0
      %413 = vmatprep.subr.mxu0 0.0
      %414 = vmatpush1.msra.mxu0 0.0
      %415 = vmatprep.subr.mxu0 0.0
      %416 = vmatpush1.msra.mxu0 0.0
      %417 = vmatprep.subr.mxu0 0.0
      %418 = vmatpush1.msra.mxu0 0.0
      %419 = vmatprep.subr.mxu0 0.0
      %420 = vmatpush1.msra.mxu0 0.0
      %421 = vmatprep.subr.mxu0 0.0
      %422 = vmatpush1.msra.mxu0 0.0
      %423 = vmatprep.subr.mxu0 0.0
      %424 = vmatpush1.msra.mxu0 0.0
      %425 = vmatprep.subr.mxu0 0.0
      %426 = vmatpush1.msra.mxu0 0.0
      %427 = vmatprep.subr.mxu0 0.0
      %428 = vmatpush1.msra.mxu0 0.0
      %429 = vmatprep.subr.mxu0 0.0
      %430 = vmatpush1.msra.mxu0 0.0
      %431 = vmatprep.subr.mxu0 0.0
      %432 = vmatpush1.msra.mxu0 0.0
      %433 = vmatprep.subr.mxu0 0.0
      %434 = vmatpush1.msra.mxu0 0.0
      %435 = vmatprep.subr.mxu0 0.0
      %436 = vmatpush1.msra.mxu0 0.0
      %437 = vmatprep.subr.mxu0 0.0
      %438 = vmatpush1.msra.mxu0 0.0
      %439 = vmatprep.subr.mxu0 0.0
      %440 = vmatpush1.msra.mxu0 0.0
      %441 = vmatprep.subr.mxu0 0.0
      %442 = vmatpush1.msra.mxu0 0.0
      %443 = vmatprep.subr.mxu0 0.0
      %444 = vmatpush1.msra.mxu0 0.0
      %445 = vmatprep.subr.mxu0 0.0
      %446 = vmatpush1.msra.mxu0 0.0
      %447 = vmatprep.subr.mxu0 0.0
      %448 = vmatpush1.msra.mxu0 0.0
      %449 = vmatprep.mubr.f32.mxu0 0.0
      %450 = vmatmul.mubr.f32.gmra.mrb[0].mxu0 %v383
      %v451 = vpop.f32.mrb[0].mxu0
      %v452 = vadd.f32 0.0, %v451
      %v453 = vpop.f32.mrb[0].mxu0
      %v454 = vadd.f32 0.0, %v453
      %455 = vdwg.mxu0
      %456 = vmatprep.subr.mxu0 0.0
      %457 = vmatpush1.msra.mxu0 %v315
      %458 = vmatprep.subr.mxu0 0.0
      %459 = vmatpush1.msra.mxu0 %v318
      %460 = vmatprep.subr.mxu0 0.0
      %461 = vmatpush1.msra.mxu0 %v321
      %462 = vmatprep.subr.mxu0 0.0
      %463 = vmatpush1.msra.mxu0 %v324
      %464 = vmatprep.subr.mxu0 0.0
      %465 = vmatpush1.msra.mxu0 0.0
      %466 = vmatprep.subr.mxu0 0.0
      %467 = vmatpush1.msra.mxu0 0.0
      %468 = vmatprep.subr.mxu0 0.0
      %469 = vmatpush1.msra.mxu0 0.0
      %470 = vmatprep.subr.mxu0 0.0
      %471 = vmatpush1.msra.mxu0 0.0
      %472 = vmatprep.subr.mxu0 0.0
      %473 = vmatpush1.msra.mxu0 0.0
      %474 = vmatprep.subr.mxu0 0.0
      %475 = vmatpush1.msra.mxu0 0.0
      %476 = vmatprep.subr.mxu0 0.0
      %477 = vmatpush1.msra.mxu0 0.0
      %478 = vmatprep.subr.mxu0 0.0
      %479 = vmatpush1.msra.mxu0 0.0
      %480 = vmatprep.subr.mxu0 0.0
      %481 = vmatpush1.msra.mxu0 0.0
      %482 = vmatprep.subr.mxu0 0.0
      %483 = vmatpush1.msra.mxu0 0.0
      %484 = vmatprep.subr.mxu0 0.0
      %485 = vmatpush1.msra.mxu0 0.0
      %486 = vmatprep.subr.mxu0 0.0
      %487 = vmatpush1.msra.mxu0 0.0
      %488 = vmatprep.subr.mxu0 0.0
      %489 = vmatpush1.msra.mxu0 0.0
      %490 = vmatprep.subr.mxu0 0.0
      %491 = vmatpush1.msra.mxu0 0.0
      %492 = vmatprep.subr.mxu0 0.0
      %493 = vmatpush1.msra.mxu0 0.0
      %494 = vmatprep.subr.mxu0 0.0
      %495 = vmatpush1.msra.mxu0 0.0
      %496 = vmatprep.subr.mxu0 0.0
      %497 = vmatpush1.msra.mxu0 0.0
      %498 = vmatprep.subr.mxu0 0.0
      %499 = vmatpush1.msra.mxu0 0.0
      %500 = vmatprep.subr.mxu0 0.0
      %501 = vmatpush1.msra.mxu0 0.0
      %502 = vmatprep.subr.mxu0 0.0
      %503 = vmatpush1.msra.mxu0 0.0
      %504 = vmatprep.subr.mxu0 0.0
      %505 = vmatpush1.msra.mxu0 0.0
      %506 = vmatprep.subr.mxu0 0.0
      %507 = vmatpush1.msra.mxu0 0.0
      %508 = vmatprep.subr.mxu0 0.0
      %509 = vmatpush1.msra.mxu0 0.0
      %510 = vmatprep.subr.mxu0 0.0
      %511 = vmatpush1.msra.mxu0 0.0
      %512 = vmatprep.subr.mxu0 0.0
      %513 = vmatpush1.msra.mxu0 0.0
      %514 = vmatprep.subr.mxu0 0.0
      %515 = vmatpush1.msra.mxu0 0.0
      %516 = vmatprep.subr.mxu0 0.0
      %517 = vmatpush1.msra.mxu0 0.0
      %518 = vmatprep.subr.mxu0 0.0
      %519 = vmatpush1.msra.mxu0 0.0
      %520 = vmatprep.mubr.f32.mxu0 0.0
      %521 = vmatmul.mubr.f32.gmra.mrb[0].mxu0 %v383
      %v522 = vpop.f32.mrb[0].mxu0
      %v523 = vadd.f32 0.0, %v522
      %v524 = vpop.f32.mrb[0].mxu0
      %525 = vdwg.mxu0
      %526 = vmatprep.subr.mxu0 %v326
      %527 = vmatpush1.msra.mxu0 %v325
      %528 = vmatprep.subr.mxu0 %v329
      %529 = vmatpush1.msra.mxu0 %v328
      %530 = vmatprep.subr.mxu0 %v332
      %531 = vmatpush1.msra.mxu0 %v331
      %532 = vmatprep.subr.mxu0 %v335
      %533 = vmatpush1.msra.mxu0 %v334
      %534 = vmatprep.subr.mxu0 0.0
      %535 = vmatpush1.msra.mxu0 0.0
      %536 = vmatprep.subr.mxu0 0.0
      %537 = vmatpush1.msra.mxu0 0.0
      %538 = vmatprep.subr.mxu0 0.0
      %539 = vmatpush1.msra.mxu0 0.0
      %540 = vmatprep.subr.mxu0 0.0
      %541 = vmatpush1.msra.mxu0 0.0
      %542 = vmatprep.subr.mxu0 0.0
      %543 = vmatpush1.msra.mxu0 0.0
      %544 = vmatprep.subr.mxu0 0.0
      %545 = vmatpush1.msra.mxu0 0.0
      %546 = vmatprep.subr.mxu0 0.0
      %547 = vmatpush1.msra.mxu0 0.0
      %548 = vmatprep.subr.mxu0 0.0
      %549 = vmatpush1.msra.mxu0 0.0
      %550 = vmatprep.subr.mxu0 0.0
      %551 = vmatpush1.msra.mxu0 0.0
      %552 = vmatprep.subr.mxu0 0.0
      %553 = vmatpush1.msra.mxu0 0.0
      %554 = vmatprep.subr.mxu0 0.0
      %555 = vmatpush1.msra.mxu0 0.0
      %556 = vmatprep.subr.mxu0 0.0
      %557 = vmatpush1.msra.mxu0 0.0
      %558 = vmatprep.subr.mxu0 0.0
      %559 = vmatpush1.msra.mxu0 0.0
      %560 = vmatprep.subr.mxu0 0.0
      %561 = vmatpush1.msra.mxu0 0.0
      %562 = vmatprep.subr.mxu0 0.0
      %563 = vmatpush1.msra.mxu0 0.0
      %564 = vmatprep.subr.mxu0 0.0
      %565 = vmatpush1.msra.mxu0 0.0
      %566 = vmatprep.subr.mxu0 0.0
      %567 = vmatpush1.msra.mxu0 0.0
      %568 = vmatprep.subr.mxu0 0.0
      %569 = vmatpush1.msra.mxu0 0.0
      %570 = vmatprep.subr.mxu0 0.0
      %571 = vmatpush1.msra.mxu0 0.0
      %572 = vmatprep.subr.mxu0 0.0
      %573 = vmatpush1.msra.mxu0 0.0
      %574 = vmatprep.subr.mxu0 0.0
      %575 = vmatpush1.msra.mxu0 0.0
      %576 = vmatprep.subr.mxu0 0.0
      %577 = vmatpush1.msra.mxu0 0.0
      %578 = vmatprep.subr.mxu0 0.0
      %579 = vmatpush1.msra.mxu0 0.0
      %580 = vmatprep.subr.mxu0 0.0
      %581 = vmatpush1.msra.mxu0 0.0
      %582 = vmatprep.subr.mxu0 0.0
      %583 = vmatpush1.msra.mxu0 0.0
      %584 = vmatprep.subr.mxu0 0.0
      %585 = vmatpush1.msra.mxu0 0.0
      %586 = vmatprep.subr.mxu0 0.0
      %587 = vmatpush1.msra.mxu0 0.0
      %588 = vmatprep.subr.mxu0 0.0
      %589 = vmatpush1.msra.mxu0 0.0
      %590 = vmatprep.mubr.f32.mxu0 0.0
      %591 = vmatmul.mubr.f32.gmra.mrb[0].mxu0 %v383
      %v592 = vpop.f32.mrb[0].mxu0
      %v593 = vadd.f32 0.0, %v592
      %v594 = vpop.f32.mrb[0].mxu0
      %v595 = vadd.f32 0.0, %v594
      %596 = vdwg.mxu0
      %597 = vmatprep.subr.mxu0 0.0
      %598 = vmatpush1.msra.mxu0 %v327
      %599 = vmatprep.subr.mxu0 0.0
      %600 = vmatpush1.msra.mxu0 %v330
      %601 = vmatprep.subr.mxu0 0.0
      %602 = vmatpush1.msra.mxu0 %v333
      %603 = vmatprep.subr.mxu0 0.0
      %604 = vmatpush1.msra.mxu0 %v336
      %605 = vmatprep.subr.mxu0 0.0
      %606 = vmatpush1.msra.mxu0 0.0
      %607 = vmatprep.subr.mxu0 0.0
      %608 = vmatpush1.msra.mxu0 0.0
      %609 = vmatprep.subr.mxu0 0.0
      %610 = vmatpush1.msra.mxu0 0.0
      %611 = vmatprep.subr.mxu0 0.0
      %612 = vmatpush1.msra.mxu0 0.0
      %613 = vmatprep.subr.mxu0 0.0
      %614 = vmatpush1.msra.mxu0 0.0
      %615 = vmatprep.subr.mxu0 0.0
      %616 = vmatpush1.msra.mxu0 0.0
      %617 = vmatprep.subr.mxu0 0.0
      %618 = vmatpush1.msra.mxu0 0.0
      %619 = vmatprep.subr.mxu0 0.0
      %620 = vmatpush1.msra.mxu0 0.0
      %621 = vmatprep.subr.mxu0 0.0
      %622 = vmatpush1.msra.mxu0 0.0
      %623 = vmatprep.subr.mxu0 0.0
      %624 = vmatpush1.msra.mxu0 0.0
      %625 = vmatprep.subr.mxu0 0.0
      %626 = vmatpush1.msra.mxu0 0.0
      %627 = vmatprep.subr.mxu0 0.0
      %628 = vmatpush1.msra.mxu0 0.0
      %629 = vmatprep.subr.mxu0 0.0
      %630 = vmatpush1.msra.mxu0 0.0
      %631 = vmatprep.subr.mxu0 0.0
      %632 = vmatpush1.msra.mxu0 0.0
      %633 = vmatprep.subr.mxu0 0.0
      %634 = vmatpush1.msra.mxu0 0.0
      %635 = vmatprep.subr.mxu0 0.0
      %636 = vmatpush1.msra.mxu0 0.0
      %637 = vmatprep.subr.mxu0 0.0
      %638 = vmatpush1.msra.mxu0 0.0
      %639 = vmatprep.subr.mxu0 0.0
      %640 = vmatpush1.msra.mxu0 0.0
      %641 = vmatprep.subr.mxu0 0.0
      %642 = vmatpush1.msra.mxu0 0.0
      %643 = vmatprep.subr.mxu0 0.0
      %644 = vmatpush1.msra.mxu0 0.0
      %645 = vmatprep.subr.mxu0 0.0
      %646 = vmatpush1.msra.mxu0 0.0
      %647 = vmatprep.subr.mxu0 0.0
      %648 = vmatpush1.msra.mxu0 0.0
      %649 = vmatprep.subr.mxu0 0.0
      %650 = vmatpush1.msra.mxu0 0.0
      %651 = vmatprep.subr.mxu0 0.0
      %652 = vmatpush1.msra.mxu0 0.0
      %653 = vmatprep.subr.mxu0 0.0
      %654 = vmatpush1.msra.mxu0 0.0
      %655 = vmatprep.subr.mxu0 0.0
      %656 = vmatpush1.msra.mxu0 0.0
      %657 = vmatprep.subr.mxu0 0.0
      %658 = vmatpush1.msra.mxu0 0.0
      %659 = vmatprep.subr.mxu0 0.0
      %660 = vmatpush1.msra.mxu0 0.0
      %661 = vmatprep.mubr.f32.mxu0 0.0
      %662 = vmatmul.mubr.f32.gmra.mrb[0].mxu0 %v383
      %v663 = vpop.f32.mrb[0].mxu0
      %v664 = vadd.f32 0.0, %v663
      %v665 = vpop.f32.mrb[0].mxu0
      %666 = vdwg.mxu0
      %v668 = vlaneseq
      %v669 = vshrl.u32 %v668, 7
      %v670 = vsub.s32 0, %v669
      %v671 = vrot.slane %v337, %v670
      %v672 = vlaneseq
      %v673 = vshrl.u32 %v672, 7
      %v674 = vsub.s32 1, %v673
      %v675 = vrot.slane %v337, %v674
      %v676 = vlaneseq
      %v677 = vshrl.u32 %v676, 7
      %v678 = vsub.s32 2, %v677
      %v679 = vrot.slane %v337, %v678
      %v683 = vsub.f32 %v452, %v671
      %v684 = vsub.f32 %v454, %v675
      %v685 = vsub.f32 %v523, %v679
      %v687 = vlaneseq
      %v688 = vshrl.u32 %v687, 7
      %v689 = vsub.s32 0, %v688
      %v690 = vrot.slane %v338, %v689
      %v691 = vlaneseq
      %v692 = vshrl.u32 %v691, 7
      %v693 = vsub.s32 1, %v692
      %v694 = vrot.slane %v338, %v693
      %v695 = vlaneseq
      %v696 = vshrl.u32 %v695, 7
      %v697 = vsub.s32 2, %v696
      %v698 = vrot.slane %v338, %v697
      %v702 = vsub.f32 %v593, %v690
      %v703 = vsub.f32 %v595, %v694
      %v704 = vsub.f32 %v664, %v698
      %v705 = vmul.f32 %v683, %v702
      %v706 = vmul.f32 %v684, %v703
      %v707 = vmul.f32 %v685, %v704
      %vm708 = vcmask 523264
      %v710 = vsel %vm708, %v707, 0
      %712 = vmatprep.subr.mxu0 0.0
      %713 = vmatpush1.msra.mxu0 %v339
      %714 = vmatprep.subr.mxu0 0.0
      %715 = vmatpush1.msra.mxu0 %v340
      %716 = vmatprep.subr.mxu0 0.0
      %717 = vmatpush1.msra.mxu0 %v341
      %718 = vmatprep.subr.mxu0 0.0
      %719 = vmatpush1.msra.mxu0 %v342
      %720 = vmatprep.subr.mxu0 0.0
      %721 = vmatpush1.msra.mxu0 %v343
      %722 = vmatprep.subr.mxu0 0.0
      %723 = vmatpush1.msra.mxu0 %v344
      %724 = vmatprep.subr.mxu0 0.0
      %725 = vmatpush1.msra.mxu0 %v345
      %726 = vmatprep.subr.mxu0 0.0
      %727 = vmatpush1.msra.mxu0 %v346
      %728 = vmatprep.subr.mxu0 0.0
      %729 = vmatpush1.msra.mxu0 %v347
      %730 = vmatprep.subr.mxu0 0.0
      %731 = vmatpush1.msra.mxu0 %v348
      %732 = vmatprep.subr.mxu0 0.0
      %733 = vmatpush1.msra.mxu0 %v349
      %734 = vmatprep.subr.mxu0 0.0
      %735 = vmatpush1.msra.mxu0 %v350
      %736 = vmatprep.subr.mxu0 0.0
      %737 = vmatpush1.msra.mxu0 %v351
      %738 = vmatprep.subr.mxu0 0.0
      %739 = vmatpush1.msra.mxu0 %v352
      %740 = vmatprep.subr.mxu0 0.0
      %741 = vmatpush1.msra.mxu0 %v353
      %742 = vmatprep.subr.mxu0 0.0
      %743 = vmatpush1.msra.mxu0 %v354
      %744 = vmatprep.subr.mxu0 0.0
      %745 = vmatpush1.msra.mxu0 %v355
      %746 = vmatprep.subr.mxu0 0.0
      %747 = vmatpush1.msra.mxu0 %v356
      %748 = vmatprep.subr.mxu0 0.0
      %749 = vmatpush1.msra.mxu0 %v357
      %750 = vmatprep.subr.mxu0 0.0
      %751 = vmatpush1.msra.mxu0 %v358
      %752 = vmatprep.subr.mxu0 0.0
      %753 = vmatpush1.msra.mxu0 %v359
      %754 = vmatprep.subr.mxu0 0.0
      %755 = vmatpush1.msra.mxu0 %v360
      %756 = vmatprep.subr.mxu0 0.0
      %757 = vmatpush1.msra.mxu0 %v361
      %758 = vmatprep.subr.mxu0 0.0
      %759 = vmatpush1.msra.mxu0 %v362
      %760 = vmatprep.subr.mxu0 0.0
      %761 = vmatpush1.msra.mxu0 %v363
      %762 = vmatprep.subr.mxu0 0.0
      %763 = vmatpush1.msra.mxu0 %v364
      %764 = vmatprep.subr.mxu0 0.0
      %765 = vmatpush1.msra.mxu0 %v365
      %766 = vmatprep.subr.mxu0 0.0
      %767 = vmatpush1.msra.mxu0 %v366
      %768 = vmatprep.subr.mxu0 0.0
      %769 = vmatpush1.msra.mxu0 %v367
      %770 = vmatprep.subr.mxu0 0.0
      %771 = vmatpush1.msra.mxu0 %v368
      %772 = vmatprep.subr.mxu0 0.0
      %773 = vmatpush1.msra.mxu0 %v369
      %774 = vmatprep.subr.mxu0 0.0
      %775 = vmatpush1.msra.mxu0 %v370
      %776 = vmatprep.mubr.f32.mxu0 %v706
      %777 = vmatmul.mubr.f32.gmra.mrb[0].mxu0 %v705
      %v778 = vpop.f32.mrb[0].mxu0
      %v779 = vadd.f32 0.0, %v778
      %v780 = vpop.f32.mrb[0].mxu0
      %781 = vdwg.mxu0
      %782 = vmatprep.subr.mxu0 0.0
      %783 = vmatpush1.msra.mxu0 %v371
      %784 = vmatprep.subr.mxu0 0.0
      %785 = vmatpush1.msra.mxu0 %v372
      %786 = vmatprep.subr.mxu0 0.0
      %787 = vmatpush1.msra.mxu0 %v373
      %788 = vmatprep.subr.mxu0 0.0
      %789 = vmatpush1.msra.mxu0 %v374
      %790 = vmatprep.subr.mxu0 0.0
      %791 = vmatpush1.msra.mxu0 %v375
      %792 = vmatprep.subr.mxu0 0.0
      %793 = vmatpush1.msra.mxu0 %v376
      %794 = vmatprep.subr.mxu0 0.0
      %795 = vmatpush1.msra.mxu0 %v377
      %796 = vmatprep.subr.mxu0 0.0
      %797 = vmatpush1.msra.mxu0 %v378
      %798 = vmatprep.subr.mxu0 0.0
      %799 = vmatpush1.msra.mxu0 0.0
      %800 = vmatprep.subr.mxu0 0.0
      %801 = vmatpush1.msra.mxu0 0.0
      %802 = vmatprep.subr.mxu0 0.0
      %803 = vmatpush1.msra.mxu0 0.0
      %804 = vmatprep.subr.mxu0 0.0
      %805 = vmatpush1.msra.mxu0 0.0
      %806 = vmatprep.subr.mxu0 0.0
      %807 = vmatpush1.msra.mxu0 0.0
      %808 = vmatprep.subr.mxu0 0.0
      %809 = vmatpush1.msra.mxu0 0.0
      %810 = vmatprep.subr.mxu0 0.0
      %811 = vmatpush1.msra.mxu0 0.0
      %812 = vmatprep.subr.mxu0 0.0
      %813 = vmatpush1.msra.mxu0 0.0
      %814 = vmatprep.subr.mxu0 0.0
      %815 = vmatpush1.msra.mxu0 0.0
      %816 = vmatprep.subr.mxu0 0.0
      %817 = vmatpush1.msra.mxu0 0.0
      %818 = vmatprep.subr.mxu0 0.0
      %819 = vmatpush1.msra.mxu0 0.0
      %820 = vmatprep.subr.mxu0 0.0
      %821 = vmatpush1.msra.mxu0 0.0
      %822 = vmatprep.subr.mxu0 0.0
      %823 = vmatpush1.msra.mxu0 0.0
      %824 = vmatprep.subr.mxu0 0.0
      %825 = vmatpush1.msra.mxu0 0.0
      %826 = vmatprep.subr.mxu0 0.0
      %827 = vmatpush1.msra.mxu0 0.0
      %828 = vmatprep.subr.mxu0 0.0
      %829 = vmatpush1.msra.mxu0 0.0
      %830 = vmatprep.subr.mxu0 0.0
      %831 = vmatpush1.msra.mxu0 0.0
      %832 = vmatprep.subr.mxu0 0.0
      %833 = vmatpush1.msra.mxu0 0.0
      %834 = vmatprep.subr.mxu0 0.0
      %835 = vmatpush1.msra.mxu0 0.0
      %836 = vmatprep.subr.mxu0 0.0
      %837 = vmatpush1.msra.mxu0 0.0
      %838 = vmatprep.subr.mxu0 0.0
      %839 = vmatpush1.msra.mxu0 0.0
      %840 = vmatprep.subr.mxu0 0.0
      %841 = vmatpush1.msra.mxu0 0.0
      %842 = vmatprep.subr.mxu0 0.0
      %843 = vmatpush1.msra.mxu0 0.0
      %844 = vmatprep.subr.mxu0 0.0
      %845 = vmatpush1.msra.mxu0 0.0
      %846 = vmatprep.mubr.f32.mxu0 0.0
      %847 = vmatmul.mubr.f32.gmra.mrb[0].mxu0 %v710
      %v848 = vpop.f32.mrb[0].mxu0
      %v849 = vadd.f32 %v779, %v848
      %v850 = vpop.f32.mrb[0].mxu0
      %851 = vdwg.mxu0
      %v852 = vmul.f32 %v849, -0.5
      %v853 = vmul.f32 %v852, 1.442695
      %v854 = vpow.pop %v853
      %vm855 = vcmask 80896
      %v856 = vsel %vm855, %v854, 0.0
      %857 = vadd.xlane.f32.xlu0 %v856
      %v858 = vpop.xlane.xlu0 %857
      %v859 = vadd.f32 %v858, 1e-12
      %v860 = vrcp.pop %v859
      %v861 = vmul.f32 %v854, %v860
      %v863 = vsel %vm855, %v861, 0
      %vm865 = vcmask 1041408
      %v867 = vsel %vm865, %v380, 0
      %869 = vmatprep.subr.mxu0 0.0
      %870 = vmatpush1.msra.mxu0 %v379
      %871 = vmatprep.subr.mxu0 0.0
      %872 = vmatpush1.msra.mxu0 %v867
      %873 = vmatprep.subr.mxu0 0.0
      %874 = vmatpush1.msra.mxu0 0.0
      %875 = vmatprep.subr.mxu0 0.0
      %876 = vmatpush1.msra.mxu0 0.0
      %877 = vmatprep.subr.mxu0 0.0
      %878 = vmatpush1.msra.mxu0 0.0
      %879 = vmatprep.subr.mxu0 0.0
      %880 = vmatpush1.msra.mxu0 0.0
      %881 = vmatprep.subr.mxu0 0.0
      %882 = vmatpush1.msra.mxu0 0.0
      %883 = vmatprep.subr.mxu0 0.0
      %884 = vmatpush1.msra.mxu0 0.0
      %885 = vmatprep.subr.mxu0 0.0
      %886 = vmatpush1.msra.mxu0 0.0
      %887 = vmatprep.subr.mxu0 0.0
      %888 = vmatpush1.msra.mxu0 0.0
      %889 = vmatprep.subr.mxu0 0.0
      %890 = vmatpush1.msra.mxu0 0.0
      %891 = vmatprep.subr.mxu0 0.0
      %892 = vmatpush1.msra.mxu0 0.0
      %893 = vmatprep.subr.mxu0 0.0
      %894 = vmatpush1.msra.mxu0 0.0
      %895 = vmatprep.subr.mxu0 0.0
      %896 = vmatpush1.msra.mxu0 0.0
      %897 = vmatprep.subr.mxu0 0.0
      %898 = vmatpush1.msra.mxu0 0.0
      %899 = vmatprep.subr.mxu0 0.0
      %900 = vmatpush1.msra.mxu0 0.0
      %901 = vmatprep.subr.mxu0 0.0
      %902 = vmatpush1.msra.mxu0 0.0
      %903 = vmatprep.subr.mxu0 0.0
      %904 = vmatpush1.msra.mxu0 0.0
      %905 = vmatprep.subr.mxu0 0.0
      %906 = vmatpush1.msra.mxu0 0.0
      %907 = vmatprep.subr.mxu0 0.0
      %908 = vmatpush1.msra.mxu0 0.0
      %909 = vmatprep.subr.mxu0 0.0
      %910 = vmatpush1.msra.mxu0 0.0
      %911 = vmatprep.subr.mxu0 0.0
      %912 = vmatpush1.msra.mxu0 0.0
      %913 = vmatprep.subr.mxu0 0.0
      %914 = vmatpush1.msra.mxu0 0.0
      %915 = vmatprep.subr.mxu0 0.0
      %916 = vmatpush1.msra.mxu0 0.0
      %917 = vmatprep.subr.mxu0 0.0
      %918 = vmatpush1.msra.mxu0 0.0
      %919 = vmatprep.subr.mxu0 0.0
      %920 = vmatpush1.msra.mxu0 0.0
      %921 = vmatprep.subr.mxu0 0.0
      %922 = vmatpush1.msra.mxu0 0.0
      %923 = vmatprep.subr.mxu0 0.0
      %924 = vmatpush1.msra.mxu0 0.0
      %925 = vmatprep.subr.mxu0 0.0
      %926 = vmatpush1.msra.mxu0 0.0
      %927 = vmatprep.subr.mxu0 0.0
      %928 = vmatpush1.msra.mxu0 0.0
      %929 = vmatprep.subr.mxu0 0.0
      %930 = vmatpush1.msra.mxu0 0.0
      %931 = vmatprep.subr.mxu0 0.0
      %932 = vmatpush1.msra.mxu0 0.0
      %933 = vmatprep.mubr.f32.mxu0 0.0
      %934 = vmatmul.mubr.f32.gmra.mrb[0].mxu0 %v863
      %v935 = vpop.f32.mrb[0].mxu0
      %v936 = vadd.f32 0.0, %v935
      %v937 = vpop.f32.mrb[0].mxu0
      %938 = vdwg.mxu0
      %vm939 = vcmask 31744
      %940 = vst.msk [vmem:[%s307] sm:$0xff] %vm939, %v936
      %v941 = vlaneseq
      %v942 = vand.u32 %v941, 127
      %v943 = vsel %vm939, %v936, -inf
      %944 = vmax.xlane.f32.xlu0 %v943
      %v945 = vpop.xlane.xlu0 %944
      %vm946 = vcmp.ge.f32.partialorder %v936, %v945
      %v947 = vsel %vm946, %v942, 4
      %v948 = vsel %vm939, %v947, 2147483647
      %v949 = vand.u32 %v948, 65535
      %v950 = vshra.s32 %v948, 16
      %v951 = vcvt.s32.f32 %v949
      %v952 = vcvt.s32.f32 %v950
      %953 = vmin.xlane.f32.xlu0 %v952
      %v954 = vpop.xlane.xlu0 %953
      %vm955 = vcmp.eq.f32.partialorder %v952, %v954
      %v956 = vsel %vm955, %v951, inf
      %957 = vmin.xlane.f32.xlu0 %v956
      %v958 = vpop.xlane.xlu0 %957
      %v959 = vcvt.f32.s32 %v958
      %v960 = vcvt.f32.s32 %v954
      %v961 = vshll.u32 %v960, 16
      %v962 = vadd.s32 %v961, %v959
      %v963 = vsel %vm855, %v854, -inf
      %964 = vmax.xlane.f32.xlu0 %v963
      %v965 = vpop.xlane.xlu0 %964
      %vm966 = vcmp.ge.f32.partialorder %v854, %v965
      %v967 = vsel %vm966, %v942, 10
      %v968 = vsel %vm855, %v967, 2147483647
      %v969 = vand.u32 %v968, 65535
      %v970 = vshra.s32 %v968, 16
      %v971 = vcvt.s32.f32 %v969
      %v972 = vcvt.s32.f32 %v970
      %973 = vmin.xlane.f32.xlu0 %v972
      %v974 = vpop.xlane.xlu0 %973
      %vm975 = vcmp.eq.f32.partialorder %v972, %v974
      %v976 = vsel %vm975, %v971, inf
      %977 = vmin.xlane.f32.xlu0 %v976
      %v978 = vpop.xlane.xlu0 %977
      %v979 = vcvt.f32.s32 %v978
      %v980 = vcvt.f32.s32 %v974
      %v981 = vshll.u32 %v980, 16
      %v982 = vadd.s32 %v981, %v979
      %vm983 = vcmask 7168
      %v984 = vsel %vm983, %v962, %v982
      %vm985 = vcmask 15360
      %986 = vst.msk [vmem:[%s311] sm:$0xff] %vm985, %v984
      %p987 = scmp.lt.s32.totalorder %s20, 1
      %s988 = scalar_select %p987, %s20, 1
      %s989 = smul.addr %s988, 8
      %s990 = scalar_lea.vmem %s7, %s989
      %p991 = scmp.lt.s32.totalorder %s20, 1
      %s992 = scalar_select %p991, %s20, 1
      %s993 = smul.addr %s992, 8
      %s994 = scalar_lea.vmem %s8, %s993
      // Predicated region
      $region49: #{tpu_custom_call.1} parent=47 // pred_check
        %p995 = pneg %p190
      $region50: #{tpu_custom_call.1} parent=47 // pred_check_branch
        %997 = sbr.rel (%p995) target = $region52
      $region51: #{tpu_custom_call.1} parent=47 // pred_region
        _
      $region52: #{tpu_custom_call.1} parent=47 // pred_fallthru
        _
      // Predicated region
      $region53: #{tpu_custom_call.1} parent=47 // pred_check
        %p998 = pneg %p216
      $region54: #{tpu_custom_call.1} parent=47 // pred_check_branch
        %1000 = sbr.rel (%p998) target = $region56
      $region55: #{tpu_custom_call.1} parent=47 // pred_region
        _
      $region56: #{tpu_custom_call.1} parent=47 // pred_fallthru
        _
    $region48: #{tpu_custom_call.1} parent=5 // pred_fallthru
      _
    %p1001 = scmp.le.s32.totalorder 2, %s15
    // Predicated region
    $region57: #{tpu_custom_call.1} parent=5 // pred_check
      %p1002 = pneg %p1001
    $region58: #{tpu_custom_call.1} parent=5 // pred_check_branch
      %1004 = sbr.rel (%p1002) target = $region60
    $region59: #{tpu_custom_call.1} parent=5 // pred_region
      %s1005 = ssub.s32 %s15, 2
      // Predicated region
      $region61: #{tpu_custom_call.1} parent=59 // pred_check
        %p1006 = pneg %p196
      $region62: #{tpu_custom_call.1} parent=59 // pred_check_branch
        %1008 = sbr.rel (%p1006) target = $region64
      $region63: #{tpu_custom_call.1} parent=59 // pred_region
        %p1009 = scmp.lt.s32.totalorder %s21, 1
        %s1010 = scalar_select %p1009, %s21, 1
        %s1011 = smul.addr %s1010, 8
        %s1012 = scalar_lea.vmem %s7, %s1011
      $region64: #{tpu_custom_call.1} parent=59 // pred_fallthru
        _
      // Predicated region
      $region65: #{tpu_custom_call.1} parent=59 // pred_check
        %p1013 = pneg %p222
      $region66: #{tpu_custom_call.1} parent=59 // pred_check_branch
        %1015 = sbr.rel (%p1013) target = $region68
      $region67: #{tpu_custom_call.1} parent=59 // pred_region
        %p1016 = scmp.lt.s32.totalorder %s21, 1
        %s1017 = scalar_select %p1016, %s21, 1
        %s1018 = smul.addr %s1017, 8
        %s1019 = scalar_lea.vmem %s8, %s1018
      $region68: #{tpu_custom_call.1} parent=59 // pred_fallthru
        _
    $region60: #{tpu_custom_call.1} parent=5 // pred_fallthru
      _
  $region6: #{tpu_custom_call.1} parent=0 // loop_footer
    %s19 = sadd.s32 1, %s15
  $region7: #{tpu_custom_call.1} parent=0 // loop_footer_branch
    %14 = sbr.rel target = $region3
  $region8: #{tpu_custom_call.1} parent=0 // loop_exit
    _

</llo_original>
